<compile_context>
chip_gen: v7x
topology: tpu7x:2x2x1
jax: 0.10.0
libtpu: 0.0.40
codegen_flags: <defaults>
</compile_context>

<pallas_src>
import numpy as np
import jax
import jax.numpy as jnp
from jax.experimental import pallas as pl
from jax.experimental.pallas import tpu as pltpu


def pe_kernel(last_ref, pos_ref, invf_ref, phase_ref, x_ref, o_ref):
    # last_ref:  (TB, 1)   f32   per-row last-item index
    # pos_ref:   (1, N*D)  f32   position index replicated across the D lanes of each row
    # invf_ref:  (1, N*D)  f32   1 / 10000^(2*(j//2)/D), tiled over positions
    # phase_ref: (1, N*D)  f32   (j % 2) * pi/2, tiled over positions
    # x_ref, o_ref: (TB, N*D)
    last = last_ref[...]                                   # (TB, 1)
    flag = jnp.abs(pos_ref[...] - last)                    # (TB, N*D) via broadcast
    angle = flag * invf_ref[...] + phase_ref[...]          # (TB, N*D)
    o_ref[...] = x_ref[...] + jnp.sin(angle).astype(o_ref.dtype)


def _choose_tb(batch, row_bytes, target_bytes=2 << 20):
    """Largest row-tile TB that (a) divides B, (b) keeps the block (8,128)-legal
    (TB == B or TB % 8 == 0), and (c) keeps the x block under ~2 MB."""
    valid = [tb for tb in range(1, batch + 1)
             if batch % tb == 0 and (tb == batch or tb % 8 == 0)]
    fitting = [tb for tb in valid if tb * row_bytes <= target_bytes]
    return max(fitting) if fitting else min(valid)


def positional_encoding(x, mask):
    """x: (B, N, D) float32, mask: (B, N) -> (B, N, D). Equivalent to forward(x, pos=None)."""
    B, N, D = x.shape
    ND = N * D

    # --- wrapper-side precompute (tiny, done once at trace time) -------------
    j = np.arange(D)
    inv_f = 1.0 / np.power(10000.0, (2 * (j // 2)) / D)               # (D,) float64
    pos_vec = np.repeat(np.arange(N, dtype=np.float64), D)            # (ND,)
    invf_vec = np.tile(inv_f, N)                                      # (ND,)
    phase_vec = np.tile((j % 2) * (np.pi / 2.0), N)                   # (ND,)

    pos_vec = jnp.asarray(pos_vec, dtype=jnp.float32).reshape(1, ND)
    invf_vec = jnp.asarray(invf_vec, dtype=jnp.float32).reshape(1, ND)
    phase_vec = jnp.asarray(phase_vec, dtype=jnp.float32).reshape(1, ND)

    last_col = (jnp.sum(mask.astype(jnp.float32), axis=1) - 1.0).reshape(B, 1)

    x2 = x.reshape(B, ND)                                             # lane-dense layout

    # --- tiling / VMEM budget -------------------------------------------------
    TB = _choose_tb(B, ND * 4)
    grid = (B // TB,)

    block_bytes = TB * ND * 4
    aux_bytes = 3 * ND * 4 + 8 * 128 * 4                              # pos/invf/phase + padded last col
    vmem_needed = 2 * 2 * block_bytes + 2 * aux_bytes + (2 << 20)     # double-buffered x + out + aux + slack
    vmem_limit = int(min(64 << 20, max(vmem_needed, 16 << 20)))

    cost = pl.CostEstimate(
        flops=4 * B * ND,                 # abs, mul, add, add
        transcendentals=B * ND,           # single sin per element
        bytes_accessed=(2 * B * ND + 3 * ND + B) * 4,
    )

    out = pl.pallas_call(
        pe_kernel,
        out_shape=jax.ShapeDtypeStruct((B, ND), x.dtype),
        grid_spec=pltpu.PrefetchScalarGridSpec(
            num_scalar_prefetch=0,
            grid=grid,
            in_specs=[
                pl.BlockSpec((TB, 1), lambda b: (b, 0)),    # last-item index column
                pl.BlockSpec((1, ND), lambda b: (0, 0)),    # pos (resident)
                pl.BlockSpec((1, ND), lambda b: (0, 0)),    # inv_freq (resident)
                pl.BlockSpec((1, ND), lambda b: (0, 0)),    # phase (resident)
                pl.BlockSpec((TB, ND), lambda b: (b, 0)),   # x rows
            ],
            out_specs=pl.BlockSpec((TB, ND), lambda b: (b, 0)),
        ),
        compiler_params=pltpu.CompilerParams(
            dimension_semantics=("parallel",),
            vmem_limit_bytes=vmem_limit,
        ),
        cost_estimate=cost,
    )(last_col, pos_vec, invf_vec, phase_vec, x2)

    return out.reshape(B, N, D)

# TODO(synk): the `pos is not None` branch of forward (explicit position indices) is not
# implemented; the reference PyTorch code for that branch also appears unused/ill-shaped.
# TODO(synk): for very large N*D (row > a few MB) add a second grid axis tiling the
# flattened N*D dimension; not needed at these shapes.


def reference(x, mask):
    """Pure numpy re-implementation of the PyTorch forward (pos=None) for checking."""
    B, N, D = x.shape
    last = np.sum(np.asarray(mask), axis=1).reshape(-1, 1) - 1
    flag = np.abs(np.arange(N, dtype=np.int64)[None, :] - last).astype(np.int64)  # (B, N)
    table = np.array(
        [[p / np.power(10000, 2 * (h // 2) / D) for h in range(D)] for p in range(N)]
    )
    table[:, 0::2] = np.sin(table[:, 0::2])
    table[:, 1::2] = np.cos(table[:, 1::2])
    return np.asarray(x) + table[flag].astype(np.float32)


if __name__ == "__main__":
    key = jax.random.PRNGKey(0)
    B, N, D = 2, 16, 32  # batch, n_position, d_hid

    x = jax.random.normal(key, (B, N, D), dtype=jnp.float32)

    # deterministic mask: row 0 has 10 valid items, row 1 has 16
    lengths = np.array([10, 16])
    mask_np = (np.arange(N)[None, :] < lengths[:, None]).astype(np.float32)
    mask = jnp.asarray(mask_np)

    out = positional_encoding(x, mask)
    out = jax.block_until_ready(out)

    ref = reference(x, mask_np)
    np.testing.assert_allclose(np.asarray(out), ref, rtol=1e-4, atol=2e-4)

    print("KERNEL_OK")
</pallas_src>

<mosaic_0001>
module attributes {stable_mosaic.version = 11 : i64} {
  func.func @pe_kernel(%arg0: i32, %arg1: memref<2x1xf32, #tpu.memory_space<vmem>>, %arg2: memref<1x512xf32, #tpu.memory_space<vmem>>, %arg3: memref<1x512xf32, #tpu.memory_space<vmem>>, %arg4: memref<1x512xf32, #tpu.memory_space<vmem>>, %arg5: memref<2x512xf32, #tpu.memory_space<vmem>>, %arg6: memref<2x512xf32, #tpu.memory_space<vmem>>) attributes {dimension_semantics = [#tpu.dimension_semantics<parallel>], iteration_bounds = array<i64: 1>, scalar_prefetch = 0 : i64, scratch_operands = 0 : i64, tpu.core_type = #tpu.core_type<tc>, window_params = [{transform_indices = @transform_0, window_bounds = array<i64: 2, 1>}, {pipeline_mode = #tpu.pipeline_mode<synchronous>, transform_indices = @transform_1, window_bounds = array<i64: 1, 512>}, {pipeline_mode = #tpu.pipeline_mode<synchronous>, transform_indices = @transform_2, window_bounds = array<i64: 1, 512>}, {pipeline_mode = #tpu.pipeline_mode<synchronous>, transform_indices = @transform_3, window_bounds = array<i64: 1, 512>}, {transform_indices = @transform_4, window_bounds = array<i64: 2, 512>}, {transform_indices = @transform_5, window_bounds = array<i64: 2, 512>}]} {
    %c0 = arith.constant 0 : index
    %c0_0 = arith.constant 0 : index
    %0 = vector.load %arg1[%c0, %c0_0] : memref<2x1xf32, #tpu.memory_space<vmem>>, vector<2x1xf32>
    %c0_1 = arith.constant 0 : index
    %c0_2 = arith.constant 0 : index
    %1 = vector.load %arg2[%c0_1, %c0_2] : memref<1x512xf32, #tpu.memory_space<vmem>>, vector<1x512xf32>
    %2 = vector.broadcast %1 : vector<1x512xf32> to vector<2x512xf32>
    %3 = vector.broadcast %0 : vector<2x1xf32> to vector<2x512xf32>
    %4 = arith.subf %2, %3 : vector<2x512xf32>
    %5 = math.absf %4 : vector<2x512xf32>
    %c0_3 = arith.constant 0 : index
    %c0_4 = arith.constant 0 : index
    %6 = vector.load %arg3[%c0_3, %c0_4] : memref<1x512xf32, #tpu.memory_space<vmem>>, vector<1x512xf32>
    %7 = vector.broadcast %6 : vector<1x512xf32> to vector<2x512xf32>
    %8 = arith.mulf %5, %7 : vector<2x512xf32>
    %c0_5 = arith.constant 0 : index
    %c0_6 = arith.constant 0 : index
    %9 = vector.load %arg4[%c0_5, %c0_6] : memref<1x512xf32, #tpu.memory_space<vmem>>, vector<1x512xf32>
    %10 = vector.broadcast %9 : vector<1x512xf32> to vector<2x512xf32>
    %11 = arith.addf %8, %10 : vector<2x512xf32>
    %c0_7 = arith.constant 0 : index
    %c0_8 = arith.constant 0 : index
    %12 = vector.load %arg5[%c0_7, %c0_8] : memref<2x512xf32, #tpu.memory_space<vmem>>, vector<2x512xf32>
    %13 = math.sin %11 : vector<2x512xf32>
    %14 = arith.addf %12, %13 : vector<2x512xf32>
    %c0_9 = arith.constant 0 : index
    %c0_10 = arith.constant 0 : index
    %15 = vector.load %arg6[%c0_9, %c0_10] : memref<2x512xf32, #tpu.memory_space<vmem>>, vector<2x512xf32>
    tpu.vector_store %arg6[%c0_9, %c0_10], %14 {strides = array<i32>} : memref<2x512xf32, #tpu.memory_space<vmem>>, vector<2x512xf32>,
    return
  }
  func.func @transform_0(%arg0: i32) -> (i32, i32) {
    %c0_i32 = arith.constant 0 : i32
    %c0_i32_0 = arith.constant 0 : i32
    return %arg0, %c0_i32 : i32, i32
  }
  func.func @transform_1(%arg0: i32) -> (i32, i32) {
    %c0_i32 = arith.constant 0 : i32
    %c0_i32_0 = arith.constant 0 : i32
    %c0_i32_1 = arith.constant 0 : i32
    return %c0_i32, %c0_i32_0 : i32, i32
  }
  func.func @transform_2(%arg0: i32) -> (i32, i32) {
    %c0_i32 = arith.constant 0 : i32
    %c0_i32_0 = arith.constant 0 : i32
    %c0_i32_1 = arith.constant 0 : i32
    return %c0_i32, %c0_i32_0 : i32, i32
  }
  func.func @transform_3(%arg0: i32) -> (i32, i32) {
    %c0_i32 = arith.constant 0 : i32
    %c0_i32_0 = arith.constant 0 : i32
    %c0_i32_1 = arith.constant 0 : i32
    return %c0_i32, %c0_i32_0 : i32, i32
  }
  func.func @transform_4(%arg0: i32) -> (i32, i32) {
    %c0_i32 = arith.constant 0 : i32
    %c0_i32_0 = arith.constant 0 : i32
    return %arg0, %c0_i32 : i32, i32
  }
  func.func @transform_5(%arg0: i32) -> (i32, i32) {
    %c0_i32 = arith.constant 0 : i32
    %c0_i32_0 = arith.constant 0 : i32
    return %arg0, %c0_i32 : i32, i32
  }
}

</mosaic_0001>

<llo_original>
// kernel: tpu_custom_call.1
$region0: #{tpu_custom_call.1}
  #allocation0 [shape = 'u32[]', space=smem, size = 0x4, offset = 0x4, fixed_abs, tag = 'smem constant byte address 0x4 - core index']
  #allocation1 [shape = 'u32[144,128]{1,0:T(1,128)}', space=vmem, size = 0x12000, scoped, tag = 'internal scratch']
  %s0 = inlined_call_operand.vmem [shape: f32[2,1], index: 0, kind: input, shape index: {}]
  %s1 = inlined_call_operand.vmem [shape: f32[1,512], index: 1, kind: input, shape index: {}]
  %s2 = inlined_call_operand.hbm [shape: f32[1,512], index: 2, kind: input, shape index: {}]
  %s3 = inlined_call_operand.hbm [shape: f32[1,512], index: 3, kind: input, shape index: {}]
  %s4 = inlined_call_operand.vmem [shape: f32[2,512], index: 4, kind: input, shape index: {}]
  %s5 = inlined_call_operand.hbm [shape: f32[2,512], index: 5, kind: output, shape index: {}]
  %s6 = sld [smem:[#allocation0]]
  $region38: #{tpu_custom_call.1} parent=0
    _
  %s8 = ssub.s32 1, %s6
  %s9 = scalar_select 0, %s8, %s6
  $region1: #{tpu_custom_call.1} parent=0
    #allocation2 [shape = 'u8[2048]{0}', space=vmem, size = 0x800, scoped, tag = 'input window, operand 2, single buffered']
    #allocation3 [shape = 's32[1]{0}', space=sflag, size = 0x4, scoped, tag = 'scoped memory for tpu_custom_call.1']
    #allocation4 [shape = 's32[1]{0}', space=sflag, size = 0x4, scoped, tag = 'scoped memory for tpu_custom_call.1']
    #allocation5 [shape = 'u8[2048]{0}', space=vmem, size = 0x800, scoped, tag = 'input window, operand 3, single buffered']
    #allocation6 [shape = 's32[1]{0}', space=sflag, size = 0x4, scoped, tag = 'scoped memory for tpu_custom_call.1']
    #allocation7 [shape = 'u8[4096]{0}', space=vmem, size = 0x1000, scoped, tag = 'output window, operand 0, single buffered']
    %10 = vsyncpa [#allocation3], 0
    %11 = vsyncpa [#allocation6], 0
    %12 = vsyncpa [#allocation4], 0
    // Predicated region
    $region2: #{tpu_custom_call.1} parent=1 // pred_check
      _
    $region3: #{tpu_custom_call.1} parent=1 // pred_check_branch
      %14 = sbr.rel (0) target = $region5
    $region4: #{tpu_custom_call.1} parent=1 // pred_region
      _
    $region5: #{tpu_custom_call.1} parent=1 // pred_fallthru
      _
    // Predicated region
    $region6: #{tpu_custom_call.1} parent=1 // pred_check
      _
    $region7: #{tpu_custom_call.1} parent=1 // pred_check_branch
      %16 = sbr.rel (0) target = $region9
    $region8: #{tpu_custom_call.1} parent=1 // pred_region
      _
    $region9: #{tpu_custom_call.1} parent=1 // pred_fallthru
      _
    // Predicated region
    $region10: #{tpu_custom_call.1} parent=1 // pred_check
      _
    $region11: #{tpu_custom_call.1} parent=1 // pred_check_branch
      %18 = sbr.rel (0) target = $region13
    $region12: #{tpu_custom_call.1} parent=1 // pred_region
      %s20 = ssub.s32 64, 64
      %21 = vsyncadd [#allocation3], %s20
      %s23 = sshll.u32 [#allocation2], 4
      %s24 = int_to_ptr.vmem [resolvable:$true] %s23
      %26 = dma.hbm_to_vmem [thread:$0]  %s2, 64, %s24, [#allocation3]
    $region13: #{tpu_custom_call.1} parent=1 // pred_fallthru
      _
    // Predicated region
    $region14: #{tpu_custom_call.1} parent=1 // pred_check
      _
    $region15: #{tpu_custom_call.1} parent=1 // pred_check_branch
      %28 = sbr.rel (0) target = $region17
    $region16: #{tpu_custom_call.1} parent=1 // pred_region
      %s30 = ssub.s32 64, 64
      %31 = vsyncadd [#allocation6], %s30
      %s33 = sshll.u32 [#allocation5], 4
      %s34 = int_to_ptr.vmem [resolvable:$true] %s33
      %36 = dma.hbm_to_vmem [thread:$0]  %s3, 64, %s34, [#allocation6]
    $region17: #{tpu_custom_call.1} parent=1 // pred_fallthru
      _
    // Predicated region
    $region18: #{tpu_custom_call.1} parent=1 // pred_check
      _
    $region19: #{tpu_custom_call.1} parent=1 // pred_check_branch
      %38 = sbr.rel (0) target = $region21
    $region20: #{tpu_custom_call.1} parent=1 // pred_region
      _
    $region21: #{tpu_custom_call.1} parent=1 // pred_fallthru
      _
    // Predicated region
    $region22: #{tpu_custom_call.1} parent=1 // pred_check
      _
    $region23: #{tpu_custom_call.1} parent=1 // pred_check_branch
      %40 = sbr.rel (0) target = $region25
    $region24: #{tpu_custom_call.1} parent=1 // pred_region
      %41 = dma.done [#allocation3], 64
    $region25: #{tpu_custom_call.1} parent=1 // pred_fallthru
      _
    // Predicated region
    $region26: #{tpu_custom_call.1} parent=1 // pred_check
      _
    $region27: #{tpu_custom_call.1} parent=1 // pred_check_branch
      %43 = sbr.rel (0) target = $region29
    $region28: #{tpu_custom_call.1} parent=1 // pred_region
      %44 = dma.done [#allocation6], 64
    $region29: #{tpu_custom_call.1} parent=1 // pred_fallthru
      _
    %v45 = vld [vmem:[%s0] sm:$0x3]
    %v46 = vld [vmem:[%s1] sm:$0xf]
    %v48 = vlaneseq
    %v49 = vshrl.u32 %v48, 7
    %v50 = vsub.s32 0, %v49
    %v51 = vrot.slane %v46, %v50
    %v52 = vlaneseq
    %v53 = vshrl.u32 %v52, 7
    %v54 = vsub.s32 1, %v53
    %v55 = vrot.slane %v46, %v54
    %v56 = vlaneseq
    %v57 = vshrl.u32 %v56, 7
    %v58 = vsub.s32 2, %v57
    %v59 = vrot.slane %v46, %v58
    %v60 = vlaneseq
    %v61 = vshrl.u32 %v60, 7
    %v62 = vsub.s32 3, %v61
    %v63 = vrot.slane %v46, %v62
    %69 = vset.pattern.permute.xlu0 0
    %70 = vperm.xlu0 %69, %v45
    %v71 = vpop.permute.xlu0 %70
    %v73 = vsub.f32 %v51, %v71
    %v74 = vsub.f32 %v55, %v71
    %v75 = vsub.f32 %v59, %v71
    %v76 = vsub.f32 %v63, %v71
    %v77 = vand.u32 2147483647, %v73
    %v78 = vand.u32 2147483647, %v74
    %v79 = vand.u32 2147483647, %v75
    %v80 = vand.u32 2147483647, %v76
    %v81 = vld [vmem:[#allocation2] sm:$0xf]
    %v83 = vlaneseq
    %v84 = vshrl.u32 %v83, 7
    %v85 = vsub.s32 0, %v84
    %v86 = vrot.slane %v81, %v85
    %v87 = vlaneseq
    %v88 = vshrl.u32 %v87, 7
    %v89 = vsub.s32 1, %v88
    %v90 = vrot.slane %v81, %v89
    %v91 = vlaneseq
    %v92 = vshrl.u32 %v91, 7
    %v93 = vsub.s32 2, %v92
    %v94 = vrot.slane %v81, %v93
    %v95 = vlaneseq
    %v96 = vshrl.u32 %v95, 7
    %v97 = vsub.s32 3, %v96
    %v98 = vrot.slane %v81, %v97
    %v103 = vmul.f32 %v77, %v86
    %v104 = vmul.f32 %v78, %v90
    %v105 = vmul.f32 %v79, %v94
    %v106 = vmul.f32 %v80, %v98
    %v107 = vld [vmem:[#allocation5] sm:$0xf]
    %v109 = vlaneseq
    %v110 = vshrl.u32 %v109, 7
    %v111 = vsub.s32 0, %v110
    %v112 = vrot.slane %v107, %v111
    %v113 = vlaneseq
    %v114 = vshrl.u32 %v113, 7
    %v115 = vsub.s32 1, %v114
    %v116 = vrot.slane %v107, %v115
    %v117 = vlaneseq
    %v118 = vshrl.u32 %v117, 7
    %v119 = vsub.s32 2, %v118
    %v120 = vrot.slane %v107, %v119
    %v121 = vlaneseq
    %v122 = vshrl.u32 %v121, 7
    %v123 = vsub.s32 3, %v122
    %v124 = vrot.slane %v107, %v123
    %v129 = vadd.f32 %v103, %v112
    %v130 = vadd.f32 %v104, %v116
    %v131 = vadd.f32 %v105, %v120
    %v132 = vadd.f32 %v106, %v124
    %v133 = vld [vmem:[%s4] sm:$0xff]
    %v134 = vand.u32 2147483647, %v129
    %vm135 = vcmp.le.f32.partialorder %v134, 0.7853982
    %vm136 = vcmp.lt.s32.totalorder %v129, 0
    %v137 = vand.u32 %v129, 2139095040
    %v138 = vshrl.u32 %v137, 23
    %v139 = vsub.s32 %v138, 127
    %v140 = vand.u32 2147483647, %v129
    %v141 = vand.u32 %v140, 8388607
    %v142 = vor.u32 %v141, 8388608
    %v143 = vsub.s32 0, %v142
    %v144 = vadd.s32 %v139, 1
    %vm145 = vcmp.gt.s32.totalorder %v144, 0
    %v146 = vsel %vm145, %v144, 0
    %v147 = vshrl.u32 %v146, 5
    %v148 = vand.u32 %v146, 31
    %v149 = vsub.s32 32, %v148
    %v150 = vshrl.u32 683565275, %v149
    %v151 = vshll.u32 683565275, %v148
    %v152 = vshrl.u32 2475754826, %v149
    %v153 = vor.u32 %v151, %v152
    %v154 = vshll.u32 2475754826, %v148
    %v155 = vshrl.u32 2131351028, %v149
    %v156 = vor.u32 %v154, %v155
    %v157 = vshll.u32 2131351028, %v148
    %v158 = vshrl.u32 2102212464, %v149
    %v159 = vor.u32 %v157, %v158
    %v160 = vshll.u32 2102212464, %v148
    %v161 = vshrl.u32 920167782, %v149
    %v162 = vor.u32 %v160, %v161
    %v163 = vshll.u32 920167782, %v148
    %v164 = vshrl.u32 1326507024, %v149
    %v165 = vor.u32 %v163, %v164
    %vm166 = vcmp.lt.s32.totalorder %v147, 1
    %vm167 = vcmp.lt.s32.totalorder %v147, 2
    %vm168 = vcmp.lt.s32.totalorder %v147, 3
    %vm169 = vcmp.lt.s32.totalorder %v147, 4
    %v170 = vsel %vm166, %v150, %v153
    %v171 = vsel %vm169, %v159, 2102212464
    %v172 = vsel %vm168, %v156, %v171
    %v173 = vsel %vm167, %v170, %v172
    %v174 = vsel %vm166, %v153, %v156
    %v175 = vsel %vm169, %v162, 920167782
    %v176 = vsel %vm168, %v159, %v175
    %v177 = vsel %vm167, %v174, %v176
    %v178 = vsel %vm166, %v156, %v159
    %v179 = vsel %vm169, %v165, 1326507024
    %v180 = vsel %vm168, %v162, %v179
    %v181 = vsel %vm167, %v178, %v180
    %v182 = vshll.u32 %v142, 8
    %v183 = vmul.u32.u64.compose %v182, %v181
    %v184 = vextract.low.u32 %v183
    %v185 = vextract.high.u32 %v183
    %v186 = vmul.u32.u64.compose %v182, %v177
    %v187 = vextract.low.u32 %v186
    %v188 = vextract.high.u32 %v186
    %v189 = vmul.u32 %v182, %v173
    %v190 = vadd.s32 %v185, %v187
    %vm191 = vc.u32 %v185, %v187
    %v192 = vadd.s32 %v188, 1
    %v193 = vsel %vm191, %v192, %v188
    %v194 = vadd.s32 %v189, %v193
    %v195 = vadd.s32 %v194, 536870912
    %v196 = vshrl.u32 %v195, 30
    %v197 = vshll.u32 %v196, 30
    %v198 = vsub.s32 %v194, %v197
    %vm199 = vcmp.lt.s32.totalorder %v198, 0
    %v200 = vsub.s32 0, %v198
    %v201 = vsel %vm199, %v200, %v198
    %v202 = vclz %v201
    %v203 = vsub.s32 %v202, 2
    %vm204 = vcmp.gt.s32.totalorder 0, %v203
    %v205 = vsel %vm204, 0, %v203
    %v206 = vsub.s32 32, %v205
    %v207 = vshll.u32 %v198, %v205
    %v208 = vshrl.u32 %v190, %v206
    %v209 = vor.u32 %v207, %v208
    %v210 = vsub.s32 4294967266, %v205
    %v211 = vadd.s32 %v210, 127
    %v212 = vshll.u32 %v211, 23
    %v213 = vor.u32 4788187, %v212
    %v214 = vand.u32 2147483647, %v213
    %v216 = vcvt.s32.f32 %v209
    %v217 = vmul.f32 %v216, %v214
    %v218 = vxor.u32 %v217, 2147483648
    %v219 = vsel %vm136, %v218, %v217
    %v220 = vsub.s32 4, %v196
    %v221 = vsel %vm136, %v220, %v196
    %v222 = vsel %vm135, %v129, %v219
    %v223 = vsel %vm135, 0, %v221
    %v224 = vcosq.f32.pop %v222
    %v225 = vsinq.f32.pop %v222
    %vm226 = vweird.f32 %v129
    %v227 = vadd.s32 %v223, 3
    %v228 = vand.u32 %v227, 3
    %vm229 = vcmp.lt.s32.totalorder %v228, 2
    %vm230 = vcmp.eq.s32.totalorder %v228, 0
    %v231 = vxor.u32 %v225, 2147483648
    %v232 = vsel %vm230, %v224, %v231
    %vm233 = vcmp.eq.s32.totalorder %v228, 2
    %v234 = vxor.u32 %v224, 2147483648
    %v235 = vsel %vm233, %v234, %v225
    %v236 = vsel %vm229, %v232, %v235
    %v237 = vsel %vm226, nan, %v236
    %v238 = vand.u32 2147483647, %v130
    %vm239 = vcmp.le.f32.partialorder %v238, 0.7853982
    %vm240 = vcmp.lt.s32.totalorder %v130, 0
    %v241 = vand.u32 %v130, 2139095040
    %v242 = vshrl.u32 %v241, 23
    %v243 = vsub.s32 %v242, 127
    %v244 = vand.u32 2147483647, %v130
    %v245 = vand.u32 %v244, 8388607
    %v246 = vor.u32 %v245, 8388608
    %v247 = vsub.s32 0, %v246
    %v248 = vadd.s32 %v243, 1
    %vm249 = vcmp.gt.s32.totalorder %v248, 0
    %v250 = vsel %vm249, %v248, 0
    %v251 = vshrl.u32 %v250, 5
    %v252 = vand.u32 %v250, 31
    %v253 = vsub.s32 32, %v252
    %v254 = vshrl.u32 683565275, %v253
    %v255 = vshll.u32 683565275, %v252
    %v256 = vshrl.u32 2475754826, %v253
    %v257 = vor.u32 %v255, %v256
    %v258 = vshll.u32 2475754826, %v252
    %v259 = vshrl.u32 2131351028, %v253
    %v260 = vor.u32 %v258, %v259
    %v261 = vshll.u32 2131351028, %v252
    %v262 = vshrl.u32 2102212464, %v253
    %v263 = vor.u32 %v261, %v262
    %v264 = vshll.u32 2102212464, %v252
    %v265 = vshrl.u32 920167782, %v253
    %v266 = vor.u32 %v264, %v265
    %v267 = vshll.u32 920167782, %v252
    %v268 = vshrl.u32 1326507024, %v253
    %v269 = vor.u32 %v267, %v268
    %vm270 = vcmp.lt.s32.totalorder %v251, 1
    %vm271 = vcmp.lt.s32.totalorder %v251, 2
    %vm272 = vcmp.lt.s32.totalorder %v251, 3
    %vm273 = vcmp.lt.s32.totalorder %v251, 4
    %v274 = vsel %vm270, %v254, %v257
    %v275 = vsel %vm273, %v263, 2102212464
    %v276 = vsel %vm272, %v260, %v275
    %v277 = vsel %vm271, %v274, %v276
    %v278 = vsel %vm270, %v257, %v260
    %v279 = vsel %vm273, %v266, 920167782
    %v280 = vsel %vm272, %v263, %v279
    %v281 = vsel %vm271, %v278, %v280
    %v282 = vsel %vm270, %v260, %v263
    %v283 = vsel %vm273, %v269, 1326507024
    %v284 = vsel %vm272, %v266, %v283
    %v285 = vsel %vm271, %v282, %v284
    %v286 = vshll.u32 %v246, 8
    %v287 = vmul.u32.u64.compose %v286, %v285
    %v288 = vextract.low.u32 %v287
    %v289 = vextract.high.u32 %v287
    %v290 = vmul.u32.u64.compose %v286, %v281
    %v291 = vextract.low.u32 %v290
    %v292 = vextract.high.u32 %v290
    %v293 = vmul.u32 %v286, %v277
    %v294 = vadd.s32 %v289, %v291
    %vm295 = vc.u32 %v289, %v291
    %v296 = vadd.s32 %v292, 1
    %v297 = vsel %vm295, %v296, %v292
    %v298 = vadd.s32 %v293, %v297
    %v299 = vadd.s32 %v298, 536870912
    %v300 = vshrl.u32 %v299, 30
    %v301 = vshll.u32 %v300, 30
    %v302 = vsub.s32 %v298, %v301
    %vm303 = vcmp.lt.s32.totalorder %v302, 0
    %v304 = vsub.s32 0, %v302
    %v305 = vsel %vm303, %v304, %v302
    %v306 = vclz %v305
    %v307 = vsub.s32 %v306, 2
    %vm308 = vcmp.gt.s32.totalorder 0, %v307
    %v309 = vsel %vm308, 0, %v307
    %v310 = vsub.s32 32, %v309
    %v311 = vshll.u32 %v302, %v309
    %v312 = vshrl.u32 %v294, %v310
    %v313 = vor.u32 %v311, %v312
    %v314 = vsub.s32 4294967266, %v309
    %v315 = vadd.s32 %v314, 127
    %v316 = vshll.u32 %v315, 23
    %v317 = vor.u32 4788187, %v316
    %v318 = vand.u32 2147483647, %v317
    %v320 = vcvt.s32.f32 %v313
    %v321 = vmul.f32 %v320, %v318
    %v322 = vxor.u32 %v321, 2147483648
    %v323 = vsel %vm240, %v322, %v321
    %v324 = vsub.s32 4, %v300
    %v325 = vsel %vm240, %v324, %v300
    %v326 = vsel %vm239, %v130, %v323
    %v327 = vsel %vm239, 0, %v325
    %v328 = vcosq.f32.pop %v326
    %v329 = vsinq.f32.pop %v326
    %vm330 = vweird.f32 %v130
    %v331 = vadd.s32 %v327, 3
    %v332 = vand.u32 %v331, 3
    %vm333 = vcmp.lt.s32.totalorder %v332, 2
    %vm334 = vcmp.eq.s32.totalorder %v332, 0
    %v335 = vxor.u32 %v329, 2147483648
    %v336 = vsel %vm334, %v328, %v335
    %vm337 = vcmp.eq.s32.totalorder %v332, 2
    %v338 = vxor.u32 %v328, 2147483648
    %v339 = vsel %vm337, %v338, %v329
    %v340 = vsel %vm333, %v336, %v339
    %v341 = vsel %vm330, nan, %v340
    %v342 = vand.u32 2147483647, %v131
    %vm343 = vcmp.le.f32.partialorder %v342, 0.7853982
    %vm344 = vcmp.lt.s32.totalorder %v131, 0
    %v345 = vand.u32 %v131, 2139095040
    %v346 = vshrl.u32 %v345, 23
    %v347 = vsub.s32 %v346, 127
    %v348 = vand.u32 2147483647, %v131
    %v349 = vand.u32 %v348, 8388607
    %v350 = vor.u32 %v349, 8388608
    %v351 = vsub.s32 0, %v350
    %v352 = vadd.s32 %v347, 1
    %vm353 = vcmp.gt.s32.totalorder %v352, 0
    %v354 = vsel %vm353, %v352, 0
    %v355 = vshrl.u32 %v354, 5
    %v356 = vand.u32 %v354, 31
    %v357 = vsub.s32 32, %v356
    %v358 = vshrl.u32 683565275, %v357
    %v359 = vshll.u32 683565275, %v356
    %v360 = vshrl.u32 2475754826, %v357
    %v361 = vor.u32 %v359, %v360
    %v362 = vshll.u32 2475754826, %v356
    %v363 = vshrl.u32 2131351028, %v357
    %v364 = vor.u32 %v362, %v363
    %v365 = vshll.u32 2131351028, %v356
    %v366 = vshrl.u32 2102212464, %v357
    %v367 = vor.u32 %v365, %v366
    %v368 = vshll.u32 2102212464, %v356
    %v369 = vshrl.u32 920167782, %v357
    %v370 = vor.u32 %v368, %v369
    %v371 = vshll.u32 920167782, %v356
    %v372 = vshrl.u32 1326507024, %v357
    %v373 = vor.u32 %v371, %v372
    %vm374 = vcmp.lt.s32.totalorder %v355, 1
    %vm375 = vcmp.lt.s32.totalorder %v355, 2
    %vm376 = vcmp.lt.s32.totalorder %v355, 3
    %vm377 = vcmp.lt.s32.totalorder %v355, 4
    %v378 = vsel %vm374, %v358, %v361
    %v379 = vsel %vm377, %v367, 2102212464
    %v380 = vsel %vm376, %v364, %v379
    %v381 = vsel %vm375, %v378, %v380
    %v382 = vsel %vm374, %v361, %v364
    %v383 = vsel %vm377, %v370, 920167782
    %v384 = vsel %vm376, %v367, %v383
    %v385 = vsel %vm375, %v382, %v384
    %v386 = vsel %vm374, %v364, %v367
    %v387 = vsel %vm377, %v373, 1326507024
    %v388 = vsel %vm376, %v370, %v387
    %v389 = vsel %vm375, %v386, %v388
    %v390 = vshll.u32 %v350, 8
    %v391 = vmul.u32.u64.compose %v390, %v389
    %v392 = vextract.low.u32 %v391
    %v393 = vextract.high.u32 %v391
    %v394 = vmul.u32.u64.compose %v390, %v385
    %v395 = vextract.low.u32 %v394
    %v396 = vextract.high.u32 %v394
    %v397 = vmul.u32 %v390, %v381
    %v398 = vadd.s32 %v393, %v395
    %vm399 = vc.u32 %v393, %v395
    %v400 = vadd.s32 %v396, 1
    %v401 = vsel %vm399, %v400, %v396
    %v402 = vadd.s32 %v397, %v401
    %v403 = vadd.s32 %v402, 536870912
    %v404 = vshrl.u32 %v403, 30
    %v405 = vshll.u32 %v404, 30
    %v406 = vsub.s32 %v402, %v405
    %vm407 = vcmp.lt.s32.totalorder %v406, 0
    %v408 = vsub.s32 0, %v406
    %v409 = vsel %vm407, %v408, %v406
    %v410 = vclz %v409
    %v411 = vsub.s32 %v410, 2
    %vm412 = vcmp.gt.s32.totalorder 0, %v411
    %v413 = vsel %vm412, 0, %v411
    %v414 = vsub.s32 32, %v413
    %v415 = vshll.u32 %v406, %v413
    %v416 = vshrl.u32 %v398, %v414
    %v417 = vor.u32 %v415, %v416
    %v418 = vsub.s32 4294967266, %v413
    %v419 = vadd.s32 %v418, 127
    %v420 = vshll.u32 %v419, 23
    %v421 = vor.u32 4788187, %v420
    %v422 = vand.u32 2147483647, %v421
    %v424 = vcvt.s32.f32 %v417
    %v425 = vmul.f32 %v424, %v422
    %v426 = vxor.u32 %v425, 2147483648
    %v427 = vsel %vm344, %v426, %v425
    %v428 = vsub.s32 4, %v404
    %v429 = vsel %vm344, %v428, %v404
    %v430 = vsel %vm343, %v131, %v427
    %v431 = vsel %vm343, 0, %v429
    %v432 = vcosq.f32.pop %v430
    %v433 = vsinq.f32.pop %v430
    %vm434 = vweird.f32 %v131
    %v435 = vadd.s32 %v431, 3
    %v436 = vand.u32 %v435, 3
    %vm437 = vcmp.lt.s32.totalorder %v436, 2
    %vm438 = vcmp.eq.s32.totalorder %v436, 0
    %v439 = vxor.u32 %v433, 2147483648
    %v440 = vsel %vm438, %v432, %v439
    %vm441 = vcmp.eq.s32.totalorder %v436, 2
    %v442 = vxor.u32 %v432, 2147483648
    %v443 = vsel %vm441, %v442, %v433
    %v444 = vsel %vm437, %v440, %v443
    %v445 = vsel %vm434, nan, %v444
    %v446 = vand.u32 2147483647, %v132
    %vm447 = vcmp.le.f32.partialorder %v446, 0.7853982
    %vm448 = vcmp.lt.s32.totalorder %v132, 0
    %v449 = vand.u32 %v132, 2139095040
    %v450 = vshrl.u32 %v449, 23
    %v451 = vsub.s32 %v450, 127
    %v452 = vand.u32 2147483647, %v132
    %v453 = vand.u32 %v452, 8388607
    %v454 = vor.u32 %v453, 8388608
    %v455 = vsub.s32 0, %v454
    %v456 = vadd.s32 %v451, 1
    %vm457 = vcmp.gt.s32.totalorder %v456, 0
    %v458 = vsel %vm457, %v456, 0
    %v459 = vshrl.u32 %v458, 5
    %v460 = vand.u32 %v458, 31
    %v461 = vsub.s32 32, %v460
    %v462 = vshrl.u32 683565275, %v461
    %v463 = vshll.u32 683565275, %v460
    %v464 = vshrl.u32 2475754826, %v461
    %v465 = vor.u32 %v463, %v464
    %v466 = vshll.u32 2475754826, %v460
    %v467 = vshrl.u32 2131351028, %v461
    %v468 = vor.u32 %v466, %v467
    %v469 = vshll.u32 2131351028, %v460
    %v470 = vshrl.u32 2102212464, %v461
    %v471 = vor.u32 %v469, %v470
    %v472 = vshll.u32 2102212464, %v460
    %v473 = vshrl.u32 920167782, %v461
    %v474 = vor.u32 %v472, %v473
    %v475 = vshll.u32 920167782, %v460
    %v476 = vshrl.u32 1326507024, %v461
    %v477 = vor.u32 %v475, %v476
    %vm478 = vcmp.lt.s32.totalorder %v459, 1
    %vm479 = vcmp.lt.s32.totalorder %v459, 2
    %vm480 = vcmp.lt.s32.totalorder %v459, 3
    %vm481 = vcmp.lt.s32.totalorder %v459, 4
    %v482 = vsel %vm478, %v462, %v465
    %v483 = vsel %vm481, %v471, 2102212464
    %v484 = vsel %vm480, %v468, %v483
    %v485 = vsel %vm479, %v482, %v484
    %v486 = vsel %vm478, %v465, %v468
    %v487 = vsel %vm481, %v474, 920167782
    %v488 = vsel %vm480, %v471, %v487
    %v489 = vsel %vm479, %v486, %v488
    %v490 = vsel %vm478, %v468, %v471
    %v491 = vsel %vm481, %v477, 1326507024
    %v492 = vsel %vm480, %v474, %v491
    %v493 = vsel %vm479, %v490, %v492
    %v494 = vshll.u32 %v454, 8
    %v495 = vmul.u32.u64.compose %v494, %v493
    %v496 = vextract.low.u32 %v495
    %v497 = vextract.high.u32 %v495
    %v498 = vmul.u32.u64.compose %v494, %v489
    %v499 = vextract.low.u32 %v498
    %v500 = vextract.high.u32 %v498
    %v501 = vmul.u32 %v494, %v485
    %v502 = vadd.s32 %v497, %v499
    %vm503 = vc.u32 %v497, %v499
    %v504 = vadd.s32 %v500, 1
    %v505 = vsel %vm503, %v504, %v500
    %v506 = vadd.s32 %v501, %v505
    %v507 = vadd.s32 %v506, 536870912
    %v508 = vshrl.u32 %v507, 30
    %v509 = vshll.u32 %v508, 30
    %v510 = vsub.s32 %v506, %v509
    %vm511 = vcmp.lt.s32.totalorder %v510, 0
    %v512 = vsub.s32 0, %v510
    %v513 = vsel %vm511, %v512, %v510
    %v514 = vclz %v513
    %v515 = vsub.s32 %v514, 2
    %vm516 = vcmp.gt.s32.totalorder 0, %v515
    %v517 = vsel %vm516, 0, %v515
    %v518 = vsub.s32 32, %v517
    %v519 = vshll.u32 %v510, %v517
    %v520 = vshrl.u32 %v502, %v518
    %v521 = vor.u32 %v519, %v520
    %v522 = vsub.s32 4294967266, %v517
    %v523 = vadd.s32 %v522, 127
    %v524 = vshll.u32 %v523, 23
    %v525 = vor.u32 4788187, %v524
    %v526 = vand.u32 2147483647, %v525
    %v528 = vcvt.s32.f32 %v521
    %v529 = vmul.f32 %v528, %v526
    %v530 = vxor.u32 %v529, 2147483648
    %v531 = vsel %vm448, %v530, %v529
    %v532 = vsub.s32 4, %v508
    %v533 = vsel %vm448, %v532, %v508
    %v534 = vsel %vm447, %v132, %v531
    %v535 = vsel %vm447, 0, %v533
    %v536 = vcosq.f32.pop %v534
    %v537 = vsinq.f32.pop %v534
    %vm538 = vweird.f32 %v132
    %v539 = vadd.s32 %v535, 3
    %v540 = vand.u32 %v539, 3
    %vm541 = vcmp.lt.s32.totalorder %v540, 2
    %vm542 = vcmp.eq.s32.totalorder %v540, 0
    %v543 = vxor.u32 %v537, 2147483648
    %v544 = vsel %vm542, %v536, %v543
    %vm545 = vcmp.eq.s32.totalorder %v540, 2
    %v546 = vxor.u32 %v536, 2147483648
    %v547 = vsel %vm545, %v546, %v537
    %v548 = vsel %vm541, %v544, %v547
    %v549 = vsel %vm538, nan, %v548
    %v554 = vcombine.low %v237, %v341
    %v555 = vcombine.low %v445, %v549
    %v557 = vunpack.c.l.s4 1983009808
    %v558 = vunpack.c.0.s8 %v557
    %v559 = vlaneseq
    %v560 = vshrl.u32 %v559, 7
    %v561 = vsub.s32 %v558, %v560
    %v562 = vrot.slane %v554, %v561
    %v564 = vunpack.c.l.s4 1983009808
    %v565 = vunpack.c.0.s8 %v564
    %v566 = vlaneseq
    %v567 = vshrl.u32 %v566, 7
    %v568 = vsub.s32 %v565, %v567
    %v569 = vrot.slane %v555, %v568
    %v570 = vcombine.low %v562, %v569
    %v572 = vadd.f32 %v133, %v570
    %573 = vst [vmem:[#allocation7] sm:$0xff] %v572
    // Predicated region
    $region30: #{tpu_custom_call.1} parent=1 // pred_check
      _
    $region31: #{tpu_custom_call.1} parent=1 // pred_check_branch
      %575 = sbr.rel (0) target = $region33
    $region32: #{tpu_custom_call.1} parent=1 // pred_region
      %s577 = ssub.s32 128, 128
      %578 = vsyncadd [#allocation4], %s577
      %s580 = sshll.u32 [#allocation7], 4
      %s581 = int_to_ptr.vmem [resolvable:$true] %s580
      %583 = dma.vmem_to_hbm [thread:$0]  %s581, 128, %s5, [#allocation4]
    $region33: #{tpu_custom_call.1} parent=1 // pred_fallthru
      _
    // Predicated region
    $region34: #{tpu_custom_call.1} parent=1 // pred_check
      _
    $region35: #{tpu_custom_call.1} parent=1 // pred_check_branch
      %585 = sbr.rel (0) target = $region37
    $region36: #{tpu_custom_call.1} parent=1 // pred_region
      %586 = dma.done [#allocation4], 128
    $region37: #{tpu_custom_call.1} parent=1 // pred_fallthru
      _
    %587 = vsyncpa [#allocation3], 1
    %588 = vsyncpa [#allocation6], 1
    %589 = vsyncpa [#allocation4], 1

</llo_original>
